<compile_context>
chip_gen: v7x
topology: tpu7x:2x2x1
jax: 0.10.0
libtpu: 0.0.40
codegen_flags: <defaults>
</compile_context>

<pallas_src>
import functools
import numpy as np

import jax
import jax.numpy as jnp
from jax.experimental import pallas as pl
from jax.experimental.pallas import tpu as pltpu


# ---------------------------------------------------------------------------
# Kernel: one (H, tm) tile of  y = W @ x + b   (M lane-dense)
# ---------------------------------------------------------------------------
def dlinear_kernel(x_ref, w_ref, b_ref, o_ref):
    # x_ref: (L, tm) native dtype; w_ref: (H, L) native dtype; b_ref: (H, 1) f32.
    y = jnp.dot(w_ref[...], x_ref[...], preferred_element_type=jnp.float32)
    o_ref[...] = (y + b_ref[...]).astype(o_ref.dtype)


# ---------------------------------------------------------------------------
# One-time parameter folding (pure parameter prep, never per-step)
# ---------------------------------------------------------------------------
def _avg_matrix(L, ks):
    """(L, L) matrix A with  trend = x @ A  (replicate padding absorbed)."""
    assert ks % 2 == 1, "moving_avg folding assumes an odd kernel_size"
    half = (ks - 1) // 2
    A = np.zeros((L, L), np.float32)
    for t in range(L):
        for k in range(ks):
            src = min(max(t + k - half, 0), L - 1)      # replicate-pad clamp
            A[src, t] += 1.0 / ks
    return jnp.asarray(A)


def fold_params(params, *, input_len, ks, dtype=jnp.float32):
    """Collapse decomposition + both Linears + feature head into (H,L) W, (H,1) b."""
    L = input_len
    A = _avg_matrix(L, ks)                                       # (L, L)
    ws_t = params['ws'].T.astype(jnp.float32)                    # (L, H)
    wt_t = params['wt'].T.astype(jnp.float32)                    # (L, H)
    w_eff = ws_t + A @ (wt_t - ws_t)                             # (L, H)
    b_eff = (params['bs'] + params['bt']).astype(jnp.float32)    # (H,)

    w1 = params['w1'].reshape(6).astype(jnp.float32)
    b1 = params['b1'].reshape(6).astype(jnp.float32)
    w2 = params['w2'].reshape(6).astype(jnp.float32)
    b2 = params['b2'].reshape(()).astype(jnp.float32)
    alpha = jnp.sum(w1 * w2)
    beta = jnp.sum(b1 * w2) + b2

    H = b_eff.shape[0]
    wT = (alpha * w_eff).T.astype(dtype)                         # (H, L), model dtype
    b = (alpha * b_eff + beta).reshape(H, 1).astype(jnp.float32) # (H, 1), f32
    return {'wT': wT, 'b': b}


# ---------------------------------------------------------------------------
# Forward
# ---------------------------------------------------------------------------
@functools.partial(jax.jit, static_argnames=('out_nodes', 'block_m'))
def dlinear_forward(x, folded, *, out_nodes, block_m=1024):
    """x: (B, input_len, N) -> (B, horizon, out_nodes)."""
    B, L, N = x.shape
    wT, b = folded['wT'], folded['b']
    H = wT.shape[0]
    M = B * out_nodes

    # Only the last `out_nodes` nodes survive the final slice; make M the lane
    # axis.  This slice+transpose is fused by XLA and touches exactly the
    # B*out_nodes*L elements the kernel consumes (not the full x).
    x_ld = jnp.transpose(x[:, :, N - out_nodes:], (1, 0, 2)).reshape(L, M)

    # Tile M: single full-width block when small, else 128-aligned streaming tiles.
    if M <= block_m:
        tm, Mp = M, M
    else:
        tm = block_m
        Mp = pl.cdiv(M, tm) * tm
        if Mp != M:
            x_ld = jnp.pad(x_ld, ((0, 0), (0, Mp - M)))
    grid = (Mp // tm,)

    itemsize = x.dtype.itemsize
    cost = pl.CostEstimate(
        flops=2 * Mp * L * H,
        bytes_accessed=itemsize * (Mp * L + H * L + Mp * H) + 4 * H,
        transcendentals=0,
    )

    y_ld = pl.pallas_call(
        dlinear_kernel,
        out_shape=jax.ShapeDtypeStruct((H, Mp), x.dtype),
        grid=grid,
        in_specs=[
            pl.BlockSpec((L, tm), lambda i: (0, i)),   # x: streamed along M
            pl.BlockSpec((H, L), lambda i: (0, 0)),    # folded weight: resident
            pl.BlockSpec((H, 1), lambda i: (0, 0)),    # folded bias: resident
        ],
        out_specs=pl.BlockSpec((H, tm), lambda i: (0, i)),
        compiler_params=pltpu.CompilerParams(
            dimension_semantics=("parallel",)),        # shard M across TCs (v7x)
        cost_estimate=cost,
    )(x_ld, wT, b)

    # Tiny final layout fix-up on (H, M) only — not on full x / full y.
    y = y_ld[:, :M].reshape(H, B, out_nodes)
    return jnp.transpose(y, (1, 0, 2))                 # (B, H, out_nodes)


# ---------------------------------------------------------------------------
# Pure-JAX transcription of the PyTorch forward, for validation
# ---------------------------------------------------------------------------
def dlinear_ref(x, params, *, ks, out_nodes):
    B, L, N = x.shape
    half = (ks - 1) // 2
    xt = jnp.transpose(x, (0, 2, 1))[:, None, :, :]    # (B,1,N,L)
    front = jnp.repeat(xt[..., :1], half, axis=-1)
    end = jnp.repeat(xt[..., -1:], half, axis=-1)
    xp = jnp.concatenate([front, xt, end], axis=-1)
    trend = jnp.stack([xp[..., k:k + L] for k in range(ks)], axis=0).mean(axis=0)
    seasonal = xt - trend
    s_out = seasonal @ params['ws'].T + params['bs']
    t_out = trend @ params['wt'].T + params['bt']
    y = s_out + t_out                                   # (B,1,N,H)
    y = jnp.transpose(y, (0, 2, 1, 3))                  # (B,N,1,H)
    y = jnp.transpose(y, (0, 1, 3, 2))                  # (B,N,H,1)
    z = y @ params['w1'].T + params['b1']               # (B,N,H,6)
    z = z @ params['w2'].T + params['b2']               # (B,N,H,1)
    z = z[..., -1]                                      # (B,N,H)
    z = jnp.transpose(z, (0, 2, 1))                     # (B,H,N)
    return z[..., -out_nodes:]


if __name__ == "__main__":
    # config: input_len=16, output_len=12, var_len=1, out_capacity=4; ks=7
    B, L, N = 2, 16, 8          # batch, input_len, nodes
    H, out_nodes, ks = 12, 4, 7

    key = jax.random.PRNGKey(0)
    kx, kws, kwt, kbs, kbt, kw1, kb1, kw2, kb2 = jax.random.split(key, 9)

    x = jax.random.normal(kx, (B, L, N), jnp.float32)

    params = {
        # __init__ sets these to 1/Lag * ones; perturb so the moving-average /
        # decomposition path is actually exercised by the check.
        'ws': jnp.full((H, L), 1.0 / L, jnp.float32)
              + 0.05 * jax.random.normal(kws, (H, L), jnp.float32),
        'bs': jax.random.uniform(kbs, (H,), jnp.float32, -0.1, 0.1),
        'wt': jnp.full((H, L), 1.0 / L, jnp.float32)
              + 0.05 * jax.random.normal(kwt, (H, L), jnp.float32),
        'bt': jax.random.uniform(kbt, (H,), jnp.float32, -0.1, 0.1),
        # feature1: Linear(var_len=1, 6); feature2: Linear(6, 1)
        'w1': jax.random.uniform(kw1, (6, 1), jnp.float32, -1.0, 1.0),
        'b1': jax.random.uniform(kb1, (6,), jnp.float32, -1.0, 1.0),
        'w2': jax.random.uniform(kw2, (1, 6), jnp.float32, -0.4, 0.4),
        'b2': jax.random.uniform(kb2, (1,), jnp.float32, -0.4, 0.4),
    }

    # One-time parameter prep (hoisted out of the per-call path).
    folded = fold_params(params, input_len=L, ks=ks, dtype=x.dtype)
    folded = jax.tree_util.tree_map(jax.block_until_ready, folded)

    out = dlinear_forward(x, folded, out_nodes=out_nodes)
    out = jax.block_until_ready(out)

    ref = dlinear_ref(x, params, ks=ks, out_nodes=out_nodes)
    assert out.shape == (B, H, out_nodes), out.shape
    # algebraic folding changes FP summation order slightly -> small tolerance
    assert jnp.allclose(out, ref, atol=1e-4, rtol=1e-4), (
        float(jnp.max(jnp.abs(out - ref))))

    print("KERNEL_OK")
</pallas_src>

<mosaic_0001>
module attributes {stable_mosaic.version = 11 : i64} {
  func.func @dlinear_kernel(%arg0: i32, %arg1: memref<16x8xf32, #tpu.memory_space<vmem>>, %arg2: memref<12x16xf32, #tpu.memory_space<vmem>>, %arg3: memref<12x1xf32, #tpu.memory_space<vmem>>, %arg4: memref<12x8xf32, #tpu.memory_space<vmem>>) attributes {dimension_semantics = [#tpu.dimension_semantics<parallel>], iteration_bounds = array<i64: 1>, scalar_prefetch = 0 : i64, scratch_operands = 0 : i64, tpu.core_type = #tpu.core_type<tc>, window_params = [{transform_indices = @transform_0, window_bounds = array<i64: 16, 8>}, {pipeline_mode = #tpu.pipeline_mode<synchronous>, transform_indices = @transform_1, window_bounds = array<i64: 12, 16>}, {pipeline_mode = #tpu.pipeline_mode<synchronous>, transform_indices = @transform_2, window_bounds = array<i64: 12, 1>}, {transform_indices = @transform_3, window_bounds = array<i64: 12, 8>}]} {
    %c0 = arith.constant 0 : index
    %c0_0 = arith.constant 0 : index
    %0 = vector.load %arg2[%c0, %c0_0] : memref<12x16xf32, #tpu.memory_space<vmem>>, vector<12x16xf32>
    %c0_1 = arith.constant 0 : index
    %c0_2 = arith.constant 0 : index
    %1 = vector.load %arg1[%c0_1, %c0_2] : memref<16x8xf32, #tpu.memory_space<vmem>>, vector<16x8xf32>
    %cst = arith.constant dense<0.000000e+00> : vector<12x8xf32>
    %2 = tpu.matmul %0, %1, %cst {dimension_numbers = #tpu.dot_dimension_numbers<[1], [0], [0], [1], [0, 0, 1, 1], [], []>} : vector<12x16xf32>, vector<16x8xf32>, vector<12x8xf32> -> vector<12x8xf32>
    %c0_3 = arith.constant 0 : index
    %c0_4 = arith.constant 0 : index
    %3 = vector.load %arg3[%c0_3, %c0_4] : memref<12x1xf32, #tpu.memory_space<vmem>>, vector<12x1xf32>
    %4 = vector.broadcast %3 : vector<12x1xf32> to vector<12x8xf32>
    %5 = arith.addf %2, %4 : vector<12x8xf32>
    %c0_5 = arith.constant 0 : index
    %c0_6 = arith.constant 0 : index
    %6 = vector.load %arg4[%c0_5, %c0_6] : memref<12x8xf32, #tpu.memory_space<vmem>>, vector<12x8xf32>
    tpu.vector_store %arg4[%c0_5, %c0_6], %5 {strides = array<i32>} : memref<12x8xf32, #tpu.memory_space<vmem>>, vector<12x8xf32>,
    return
  }
  func.func @transform_0(%arg0: i32) -> (i32, i32) {
    %c0_i32 = arith.constant 0 : i32
    %c0_i32_0 = arith.constant 0 : i32
    return %c0_i32, %arg0 : i32, i32
  }
  func.func @transform_1(%arg0: i32) -> (i32, i32) {
    %c0_i32 = arith.constant 0 : i32
    %c0_i32_0 = arith.constant 0 : i32
    %c0_i32_1 = arith.constant 0 : i32
    return %c0_i32, %c0_i32_0 : i32, i32
  }
  func.func @transform_2(%arg0: i32) -> (i32, i32) {
    %c0_i32 = arith.constant 0 : i32
    %c0_i32_0 = arith.constant 0 : i32
    %c0_i32_1 = arith.constant 0 : i32
    return %c0_i32, %c0_i32_0 : i32, i32
  }
  func.func @transform_3(%arg0: i32) -> (i32, i32) {
    %c0_i32 = arith.constant 0 : i32
    %c0_i32_0 = arith.constant 0 : i32
    return %c0_i32, %arg0 : i32, i32
  }
}

</mosaic_0001>

<llo_original>
// kernel: dlinear_forward.1
$region0: #{dlinear_forward.1}
  #allocation0 [shape = 'u32[]', space=smem, size = 0x4, offset = 0x4, fixed_abs, tag = 'smem constant byte address 0x4 - core index']
  #allocation1 [shape = 'u32[144,128]{1,0:T(1,128)}', space=vmem, size = 0x12000, scoped, tag = 'internal scratch']
  %s0 = inlined_call_operand.vmem [shape: f32[16,8], index: 0, kind: input, shape index: {}]
  %s1 = inlined_call_operand.vmem [shape: f32[12,16], index: 1, kind: input, shape index: {}]
  %s2 = inlined_call_operand.vmem [shape: f32[12,1], index: 2, kind: input, shape index: {}]
  %s3 = inlined_call_operand.vmem [shape: f32[12,8], index: 3, kind: output, shape index: {}]
  %s4 = sld [smem:[#allocation0]]
  $region22: #{dlinear_forward.1} parent=0
    _
  %s6 = ssub.s32 1, %s4
  %s7 = scalar_select 0, %s6, %s4
  // Predicated region
  $region2: #{dlinear_forward.1} parent=0 // pred_check
    _
  $region3: #{dlinear_forward.1} parent=0 // pred_check_branch
    %9 = sbr.rel (0) target = $region5
  $region4: #{dlinear_forward.1} parent=0 // pred_region
    _
  $region5: #{dlinear_forward.1} parent=0 // pred_fallthru
    _
  // Predicated region
  $region6: #{dlinear_forward.1} parent=0 // pred_check
    _
  $region7: #{dlinear_forward.1} parent=0 // pred_check_branch
    %11 = sbr.rel (0) target = $region9
  $region8: #{dlinear_forward.1} parent=0 // pred_region
    _
  $region9: #{dlinear_forward.1} parent=0 // pred_fallthru
    _
  // Predicated region
  $region10: #{dlinear_forward.1} parent=0 // pred_check
    _
  $region11: #{dlinear_forward.1} parent=0 // pred_check_branch
    %13 = sbr.rel (0) target = $region13
  $region12: #{dlinear_forward.1} parent=0 // pred_region
    _
  $region13: #{dlinear_forward.1} parent=0 // pred_fallthru
    _
  %v14 = vld [vmem:[%s1] sm:$0xff]
  %v15 = vld [vmem:[%s1 + $0x8] sm:$0xf]
  %v16 = vld [vmem:[%s0] sm:$0xff]
  %v17 = vld [vmem:[%s0 + $0x8] sm:$0xff]
  %v18 = vld [vmem:[%s2] sm:$0xff]
  %v19 = vld [vmem:[%s2 + $0x8] sm:$0xf]
  %21 = vset.pattern.permute.xlu0 0
  %22 = vperm.xlu0 %21, %v18
  %v23 = vpop.permute.xlu0 %22
  %26 = vset.pattern.permute.xlu0 0
  %27 = vperm.xlu0 %26, %v19
  %v28 = vpop.permute.xlu0 %27
  %vm30 = vcmask 130048
  %v32 = vsel %vm30, %v14, 0
  %v35 = vsel %vm30, %v15, 0
  %37 = vmatprep.subr.mxu0 0.0
  %38 = vmatpush1.msra.mxu0 %v16
  %39 = vmatprep.subr.mxu0 0.0
  %40 = vmatpush1.msra.mxu0 %v17
  %41 = vmatprep.subr.mxu0 0.0
  %42 = vmatpush1.msra.mxu0 0.0
  %43 = vmatprep.subr.mxu0 0.0
  %44 = vmatpush1.msra.mxu0 0.0
  %45 = vmatprep.subr.mxu0 0.0
  %46 = vmatpush1.msra.mxu0 0.0
  %47 = vmatprep.subr.mxu0 0.0
  %48 = vmatpush1.msra.mxu0 0.0
  %49 = vmatprep.subr.mxu0 0.0
  %50 = vmatpush1.msra.mxu0 0.0
  %51 = vmatprep.subr.mxu0 0.0
  %52 = vmatpush1.msra.mxu0 0.0
  %53 = vmatprep.subr.mxu0 0.0
  %54 = vmatpush1.msra.mxu0 0.0
  %55 = vmatprep.subr.mxu0 0.0
  %56 = vmatpush1.msra.mxu0 0.0
  %57 = vmatprep.subr.mxu0 0.0
  %58 = vmatpush1.msra.mxu0 0.0
  %59 = vmatprep.subr.mxu0 0.0
  %60 = vmatpush1.msra.mxu0 0.0
  %61 = vmatprep.subr.mxu0 0.0
  %62 = vmatpush1.msra.mxu0 0.0
  %63 = vmatprep.subr.mxu0 0.0
  %64 = vmatpush1.msra.mxu0 0.0
  %65 = vmatprep.subr.mxu0 0.0
  %66 = vmatpush1.msra.mxu0 0.0
  %67 = vmatprep.subr.mxu0 0.0
  %68 = vmatpush1.msra.mxu0 0.0
  %69 = vmatprep.subr.mxu0 0.0
  %70 = vmatpush1.msra.mxu0 0.0
  %71 = vmatprep.subr.mxu0 0.0
  %72 = vmatpush1.msra.mxu0 0.0
  %73 = vmatprep.subr.mxu0 0.0
  %74 = vmatpush1.msra.mxu0 0.0
  %75 = vmatprep.subr.mxu0 0.0
  %76 = vmatpush1.msra.mxu0 0.0
  %77 = vmatprep.subr.mxu0 0.0
  %78 = vmatpush1.msra.mxu0 0.0
  %79 = vmatprep.subr.mxu0 0.0
  %80 = vmatpush1.msra.mxu0 0.0
  %81 = vmatprep.subr.mxu0 0.0
  %82 = vmatpush1.msra.mxu0 0.0
  %83 = vmatprep.subr.mxu0 0.0
  %84 = vmatpush1.msra.mxu0 0.0
  %85 = vmatprep.subr.mxu0 0.0
  %86 = vmatpush1.msra.mxu0 0.0
  %87 = vmatprep.subr.mxu0 0.0
  %88 = vmatpush1.msra.mxu0 0.0
  %89 = vmatprep.subr.mxu0 0.0
  %90 = vmatpush1.msra.mxu0 0.0
  %91 = vmatprep.subr.mxu0 0.0
  %92 = vmatpush1.msra.mxu0 0.0
  %93 = vmatprep.subr.mxu0 0.0
  %94 = vmatpush1.msra.mxu0 0.0
  %95 = vmatprep.subr.mxu0 0.0
  %96 = vmatpush1.msra.mxu0 0.0
  %97 = vmatprep.subr.mxu0 0.0
  %98 = vmatpush1.msra.mxu0 0.0
  %99 = vmatprep.subr.mxu0 0.0
  %100 = vmatpush1.msra.mxu0 0.0
  %101 = vmatprep.mubr.f32.mxu0 0.0
  %102 = vmatmul.mubr.f32.gmra.mrb[0].mxu0 %v32
  %v103 = vpop.f32.mrb[0].mxu0
  %v104 = vadd.f32 %v23, %v103
  %v105 = vpop.f32.mrb[0].mxu0
  %106 = vmatprep.mubr.f32.mxu0 0.0
  %107 = vmatmul.mubr.f32.gmra.mrb[0].mxu0 %v35
  %v108 = vpop.f32.mrb[0].mxu0
  %v109 = vadd.f32 %v28, %v108
  %v110 = vpop.f32.mrb[0].mxu0
  %111 = vdwg.mxu0
  %vm112 = vcmask 64512
  %113 = vst.msk [vmem:[%s3] sm:$0xff] %vm112, %v104
  %vm114 = vcmask 60416
  %115 = vst.msk [vmem:[%s3 + $0x8] sm:$0xf] %vm114, %v109
  // Predicated region
  $region14: #{dlinear_forward.1} parent=0 // pred_check
    _
  $region15: #{dlinear_forward.1} parent=0 // pred_check_branch
    %117 = sbr.rel (0) target = $region17
  $region16: #{dlinear_forward.1} parent=0 // pred_region
    _
  $region17: #{dlinear_forward.1} parent=0 // pred_fallthru
    _
  // Predicated region
  $region18: #{dlinear_forward.1} parent=0 // pred_check
    _
  $region19: #{dlinear_forward.1} parent=0 // pred_check_branch
    %119 = sbr.rel (0) target = $region21
  $region20: #{dlinear_forward.1} parent=0 // pred_region
    _
  $region21: #{dlinear_forward.1} parent=0 // pred_fallthru
    _

</llo_original>
